<compile_context>
chip_gen: v7x
topology: tpu7x:2x2x1
jax: 0.10.0
libtpu: 0.0.40
codegen_flags: <defaults>
</compile_context>

<pallas_src>
import functools

import numpy as np
import jax
import jax.numpy as jnp
from jax import lax
from jax.experimental import pallas as pl
from jax.experimental.pallas import tpu as pltpu

LN_EPS = 1e-6
_GELU_C = 0.7978845608028654  # sqrt(2/pi)


# ----------------------------- in-kernel helpers -----------------------------
def _gelu(x):
    # tanh-approx GELU: the transcendental lands on the EUP slot.
    return 0.5 * x * (1.0 + jnp.tanh(_GELU_C * (x + 0.044715 * (x * x * x))))


def _layernorm(x, gamma, beta):
    mean = jnp.mean(x, axis=-1, keepdims=True)
    xc = x - mean
    var = jnp.mean(xc * xc, axis=-1, keepdims=True)
    return xc * lax.rsqrt(var + LN_EPS) * gamma + beta


def _bf16(x):
    return x.astype(jnp.bfloat16)


# --------------------------------- kernel ------------------------------------
def _block_kernel(x_ref, wfc1_ref, bfc1_ref, g1_ref, be1_ref,
                  wq_ref, wk_ref, wv_ref, wproj_ref, bproj_ref,
                  g2_ref, be2_ref, wfc2_ref, out_ref, attn_buf,
                  *, bt, seq, num_heads):
    # One grid step == bt batch elements, flattened to (bt*seq, dim) rows.
    x = x_ref[...]                                        # (tm, dim) f32
    d_inner = wq_ref.shape[1]
    head_dim = d_inner // num_heads

    # --- fc1 + GELU (row-batched over all bt*seq tokens) ----------------------
    ret = jnp.dot(_bf16(x), wfc1_ref[...],
                  preferred_element_type=jnp.float32) + bfc1_ref[...]
    ret = _gelu(ret)                                      # (tm, d_inner) f32

    # --- norm1 + three 128-aligned projections (q carries the softmax scale) --
    h = _bf16(_layernorm(ret, g1_ref[...], be1_ref[...]))
    q = jnp.dot(h, wq_ref[...], preferred_element_type=jnp.float32)
    k = jnp.dot(h, wk_ref[...], preferred_element_type=jnp.float32)
    v = jnp.dot(h, wv_ref[...], preferred_element_type=jnp.float32)

    # --- attention: only the (seq, seq) softmax is per-sub-batch ---------------
    for b in range(bt):
        r0 = b * seq
        for hh in range(num_heads):
            c0 = hh * head_dim
            qb = _bf16(q[r0:r0 + seq, c0:c0 + head_dim])
            kb = _bf16(k[r0:r0 + seq, c0:c0 + head_dim])
            vb = _bf16(v[r0:r0 + seq, c0:c0 + head_dim])
            # q @ k^T via dot_general (contract last dims; no explicit transpose)
            s = lax.dot_general(qb, kb, (((1,), (1,)), ((), ())),
                                preferred_element_type=jnp.float32)
            s = s - jnp.max(s, axis=-1, keepdims=True)
            e = jnp.exp(s)
            p = e * pl.reciprocal(jnp.sum(e, axis=-1, keepdims=True), approx=True)
            attn_buf[r0:r0 + seq, c0:c0 + head_dim] = jnp.dot(
                _bf16(p), vb, preferred_element_type=jnp.float32)

    # --- attn.proj + residual + norm2 (row-batched again) ----------------------
    a = jnp.dot(_bf16(attn_buf[...]), wproj_ref[...],
                preferred_element_type=jnp.float32) + bproj_ref[...]
    ret2 = _layernorm(ret + a, g2_ref[...], be2_ref[...])

    # --- addlinear: out = x + GELU(ret2 @ Wfc) ---------------------------------
    out = x + _gelu(jnp.dot(_bf16(ret2), wfc2_ref[...],
                            preferred_element_type=jnp.float32))
    out_ref[...] = out.astype(out_ref.dtype)


# -------------------------------- wrapper ------------------------------------
def _choose_bt(B, N, target_tokens=256):
    # Smallest divisor of B whose row tile reaches ~target_tokens (keeps the
    # grid as long as possible for v7x's two TensorCores); fall back to B
    # (block == full array, always a legal BlockSpec).
    for d in range(1, B + 1):
        if B % d == 0 and d * N >= target_tokens and (d * N) % 8 == 0:
            return d
    return B


def block_pallas(x, params, *, num_heads=1):
    """x: (B, N, dim) f32; params hold PyTorch-shaped weights (out_features, in_features)."""
    B, N, dim = x.shape
    d_inner = params["fc1_w"].shape[0]
    assert d_inner % num_heads == 0
    scale = float((d_inner // num_heads) ** -0.5)

    bt = _choose_bt(B, N)          # batch elements per grid step
    tm = bt * N                    # rows per grid step

    # PyTorch (out,in) -> (in,out); matmul weights cast to bf16 once here.
    qkv_w = params["qkv_w"]                                        # (3*d_inner, d_inner)
    wfc1 = jnp.transpose(params["fc1_w"]).astype(jnp.bfloat16)     # (dim, d_inner)
    wq = (jnp.transpose(qkv_w[0:d_inner]) * scale).astype(jnp.bfloat16)       # scale folded
    wk = jnp.transpose(qkv_w[d_inner:2 * d_inner]).astype(jnp.bfloat16)
    wv = jnp.transpose(qkv_w[2 * d_inner:3 * d_inner]).astype(jnp.bfloat16)
    wproj = jnp.transpose(params["proj_w"]).astype(jnp.bfloat16)   # (d_inner, d_inner)
    wfc2 = jnp.transpose(params["fc2_w"]).astype(jnp.bfloat16)     # (d_inner, dim)
    bfc1 = params["fc1_b"].reshape(1, d_inner).astype(jnp.float32)
    bproj = params["proj_b"].reshape(1, d_inner).astype(jnp.float32)
    g1 = params["ln1_w"].reshape(1, d_inner).astype(jnp.float32)
    be1 = params["ln1_b"].reshape(1, d_inner).astype(jnp.float32)
    g2 = params["ln2_w"].reshape(1, d_inner).astype(jnp.float32)
    be2 = params["ln2_b"].reshape(1, d_inner).astype(jnp.float32)

    # Flatten (B, N, dim) -> (B*N, dim) in the wrapper (free for contiguous
    # arrays); the kernel sees (tm, dim) row tiles.
    x2d = x.reshape(B * N, dim).astype(jnp.float32)

    # Weights/params: full-array blocks with constant index_map -> resident in
    # VMEM across all grid steps (no per-step re-DMA).
    full = lambda shape: pl.BlockSpec(shape, lambda i, _n=len(shape): (0,) * _n)
    kernel = functools.partial(_block_kernel, bt=bt, seq=N, num_heads=num_heads)

    out2d = pl.pallas_call(
        kernel,
        out_shape=jax.ShapeDtypeStruct((B * N, dim), jnp.float32),
        grid=(B // bt,),
        in_specs=[
            pl.BlockSpec((tm, dim), lambda i: (i, 0)),        # x row tile
            full((dim, d_inner)),                             # fc1 weight (bf16)
            full((1, d_inner)),                               # fc1 bias
            full((1, d_inner)), full((1, d_inner)),           # norm1 gamma/beta
            full((d_inner, d_inner)),                         # Wq (bf16, scale folded)
            full((d_inner, d_inner)),                         # Wk (bf16)
            full((d_inner, d_inner)),                         # Wv (bf16)
            full((d_inner, d_inner)),                         # proj weight (bf16)
            full((1, d_inner)),                               # proj bias
            full((1, d_inner)), full((1, d_inner)),           # norm2 gamma/beta
            full((d_inner, dim)),                             # addlin fc weight (bf16)
        ],
        out_specs=pl.BlockSpec((tm, dim), lambda i: (i, 0)),
        scratch_shapes=[pltpu.VMEM((tm, d_inner), jnp.float32)],   # attn output buffer
        compiler_params=pltpu.CompilerParams(
            dimension_semantics=("parallel",),                # 2-TC sharding on v7x
        ),
    )(x2d, wfc1, bfc1, g1, be1, wq, wk, wv, wproj, bproj, g2, be2, wfc2)

    return out2d.reshape(B, N, dim)


# ------------------------- pure-JAX reference (verification) ------------------
def block_ref(x, params, *, num_heads=1):
    f32 = jnp.float32
    x = x.astype(f32)
    B, N, dim = x.shape
    d_inner = params["fc1_w"].shape[0]
    hd = d_inner // num_heads
    scale = hd ** -0.5
    hi = lax.Precision.HIGHEST

    def ln(v, g, b):
        m = jnp.mean(v, axis=-1, keepdims=True)
        var = jnp.mean((v - m) ** 2, axis=-1, keepdims=True)
        return (v - m) * lax.rsqrt(var + LN_EPS) * g + b

    gelu = lambda v: jax.nn.gelu(v, approximate=False)   # exact erf GELU

    ret = gelu(jnp.matmul(x, params["fc1_w"].T.astype(f32), precision=hi)
               + params["fc1_b"].astype(f32))
    h = ln(ret, params["ln1_w"].astype(f32), params["ln1_b"].astype(f32))
    qkv = jnp.matmul(h, params["qkv_w"].T.astype(f32), precision=hi)
    qkv = qkv.reshape(B, N, 3, num_heads, hd).transpose(2, 0, 3, 1, 4)
    q, k, v = qkv[0], qkv[1], qkv[2]
    attn = jax.nn.softmax(
        jnp.matmul(q, jnp.swapaxes(k, -2, -1), precision=hi) * scale, axis=-1)
    a = jnp.matmul(attn, v, precision=hi)                       # (B, H, N, hd)
    a = jnp.swapaxes(a, 1, 2).reshape(B, N, d_inner)
    a = jnp.matmul(a, params["proj_w"].T.astype(f32), precision=hi) \
        + params["proj_b"].astype(f32)
    ret2 = ln(ret + a, params["ln2_w"].astype(f32), params["ln2_b"].astype(f32))
    out = x + gelu(jnp.matmul(ret2, params["fc2_w"].T.astype(f32), precision=hi))
    return out


if __name__ == "__main__":
    # Small shapes consistent with the module defaults:
    #   batch=2, seq=8, model dim=32, basic_dim*expan_radio=64, basic_head=1.
    B, N, DIM = 2, 8, 32
    D_INNER, HEADS = 64, 1

    key = jax.random.PRNGKey(0)
    ks = jax.random.split(key, 11)
    init = lambda k, shape, fan_in: jax.random.normal(k, shape, jnp.float32) / np.sqrt(fan_in)

    x = jax.random.normal(ks[0], (B, N, DIM), jnp.float32)
    params = {
        "fc1_w": init(ks[1], (D_INNER, DIM), DIM),
        "fc1_b": 0.1 * jax.random.normal(ks[2], (D_INNER,), jnp.float32),
        "ln1_w": 1.0 + 0.1 * jax.random.normal(ks[3], (D_INNER,), jnp.float32),
        "ln1_b": 0.1 * jax.random.normal(ks[4], (D_INNER,), jnp.float32),
        "qkv_w": init(ks[5], (3 * D_INNER, D_INNER), D_INNER),
        "proj_w": init(ks[6], (D_INNER, D_INNER), D_INNER),
        "proj_b": 0.1 * jax.random.normal(ks[7], (D_INNER,), jnp.float32),
        "ln2_w": 1.0 + 0.1 * jax.random.normal(ks[8], (D_INNER,), jnp.float32),
        "ln2_b": 0.1 * jax.random.normal(ks[9], (D_INNER,), jnp.float32),
        "fc2_w": init(ks[10], (DIM, D_INNER), D_INNER),
    }

    out = jax.block_until_ready(block_pallas(x, params, num_heads=HEADS))
    ref = jax.block_until_ready(block_ref(x, params, num_heads=HEADS))

    assert out.shape == (B, N, DIM)
    # bf16 MXU matmuls + tanh-approx GELU in the kernel vs f32 HIGHEST / exact
    # erf reference -> loosened tolerance.
    np.testing.assert_allclose(np.asarray(out), np.asarray(ref), atol=4e-2, rtol=4e-2)

    print("KERNEL_OK")
</pallas_src>

<mosaic_0001>
module attributes {stable_mosaic.version = 11 : i64} {
  func.func @_block_kernel(%arg0: i32, %arg1: memref<16x32xf32, #tpu.memory_space<vmem>>, %arg2: memref<32x64xbf16, #tpu.memory_space<vmem>>, %arg3: memref<1x64xf32, #tpu.memory_space<vmem>>, %arg4: memref<1x64xf32, #tpu.memory_space<vmem>>, %arg5: memref<1x64xf32, #tpu.memory_space<vmem>>, %arg6: memref<64x64xbf16, #tpu.memory_space<vmem>>, %arg7: memref<64x64xbf16, #tpu.memory_space<vmem>>, %arg8: memref<64x64xbf16, #tpu.memory_space<vmem>>, %arg9: memref<64x64xbf16, #tpu.memory_space<vmem>>, %arg10: memref<1x64xf32, #tpu.memory_space<vmem>>, %arg11: memref<1x64xf32, #tpu.memory_space<vmem>>, %arg12: memref<1x64xf32, #tpu.memory_space<vmem>>, %arg13: memref<64x32xbf16, #tpu.memory_space<vmem>>, %arg14: memref<16x32xf32, #tpu.memory_space<vmem>>, %arg15: memref<16x64xf32, #tpu.memory_space<vmem>>) attributes {dimension_semantics = [#tpu.dimension_semantics<parallel>], iteration_bounds = array<i64: 1>, scalar_prefetch = 0 : i64, scratch_operands = 1 : i64, tpu.core_type = #tpu.core_type<tc>, window_params = [{transform_indices = @transform_0, window_bounds = array<i64: 16, 32>}, {pipeline_mode = #tpu.pipeline_mode<synchronous>, transform_indices = @transform_1, window_bounds = array<i64: 32, 64>}, {pipeline_mode = #tpu.pipeline_mode<synchronous>, transform_indices = @transform_2, window_bounds = array<i64: 1, 64>}, {pipeline_mode = #tpu.pipeline_mode<synchronous>, transform_indices = @transform_3, window_bounds = array<i64: 1, 64>}, {pipeline_mode = #tpu.pipeline_mode<synchronous>, transform_indices = @transform_4, window_bounds = array<i64: 1, 64>}, {pipeline_mode = #tpu.pipeline_mode<synchronous>, transform_indices = @transform_5, window_bounds = array<i64: 64, 64>}, {pipeline_mode = #tpu.pipeline_mode<synchronous>, transform_indices = @transform_6, window_bounds = array<i64: 64, 64>}, {pipeline_mode = #tpu.pipeline_mode<synchronous>, transform_indices = @transform_7, window_bounds = array<i64: 64, 64>}, {pipeline_mode = #tpu.pipeline_mode<synchronous>, transform_indices = @transform_8, window_bounds = array<i64: 64, 64>}, {pipeline_mode = #tpu.pipeline_mode<synchronous>, transform_indices = @transform_9, window_bounds = array<i64: 1, 64>}, {pipeline_mode = #tpu.pipeline_mode<synchronous>, transform_indices = @transform_10, window_bounds = array<i64: 1, 64>}, {pipeline_mode = #tpu.pipeline_mode<synchronous>, transform_indices = @transform_11, window_bounds = array<i64: 1, 64>}, {pipeline_mode = #tpu.pipeline_mode<synchronous>, transform_indices = @transform_12, window_bounds = array<i64: 64, 32>}, {transform_indices = @transform_13, window_bounds = array<i64: 16, 32>}]} {
    %c0 = arith.constant 0 : index
    %c0_0 = arith.constant 0 : index
    %0 = vector.load %arg1[%c0, %c0_0] : memref<16x32xf32, #tpu.memory_space<vmem>>, vector<16x32xf32>
    %1 = arith.truncf %0 : vector<16x32xf32> to vector<16x32xbf16>
    %c0_1 = arith.constant 0 : index
    %c0_2 = arith.constant 0 : index
    %2 = vector.load %arg2[%c0_1, %c0_2] : memref<32x64xbf16, #tpu.memory_space<vmem>>, vector<32x64xbf16>
    %cst = arith.constant dense<0.000000e+00> : vector<16x64xf32>
    %3 = tpu.matmul %1, %2, %cst {dimension_numbers = #tpu.dot_dimension_numbers<[1], [0], [0], [1], [0, 0, 1, 1], [], []>} : vector<16x32xbf16>, vector<32x64xbf16>, vector<16x64xf32> -> vector<16x64xf32>
    %c0_3 = arith.constant 0 : index
    %c0_4 = arith.constant 0 : index
    %4 = vector.load %arg3[%c0_3, %c0_4] : memref<1x64xf32, #tpu.memory_space<vmem>>, vector<1x64xf32>
    %5 = vector.broadcast %4 : vector<1x64xf32> to vector<16x64xf32>
    %6 = arith.addf %3, %5 : vector<16x64xf32>
    %cst_5 = arith.constant 5.000000e-01 : f32
    %7 = vector.broadcast %cst_5 : f32 to vector<16x64xf32>
    %8 = arith.mulf %7, %6 : vector<16x64xf32>
    %9 = arith.mulf %6, %6 : vector<16x64xf32>
    %10 = arith.mulf %9, %6 : vector<16x64xf32>
    %cst_6 = arith.constant 4.471500e-02 : f32
    %11 = vector.broadcast %cst_6 : f32 to vector<16x64xf32>
    %12 = arith.mulf %11, %10 : vector<16x64xf32>
    %13 = arith.addf %6, %12 : vector<16x64xf32>
    %cst_7 = arith.constant 0.797884583 : f32
    %14 = vector.broadcast %cst_7 : f32 to vector<16x64xf32>
    %15 = arith.mulf %14, %13 : vector<16x64xf32>
    %16 = math.tanh %15 : vector<16x64xf32>
    %cst_8 = arith.constant 1.000000e+00 : f32
    %17 = vector.broadcast %cst_8 : f32 to vector<16x64xf32>
    %18 = arith.addf %17, %16 : vector<16x64xf32>
    %19 = arith.mulf %8, %18 : vector<16x64xf32>
    %c0_9 = arith.constant 0 : index
    %c0_10 = arith.constant 0 : index
    %20 = vector.load %arg4[%c0_9, %c0_10] : memref<1x64xf32, #tpu.memory_space<vmem>>, vector<1x64xf32>
    %c0_11 = arith.constant 0 : index
    %c0_12 = arith.constant 0 : index
    %21 = vector.load %arg5[%c0_11, %c0_12] : memref<1x64xf32, #tpu.memory_space<vmem>>, vector<1x64xf32>
    %cst_13 = arith.constant dense<0.000000e+00> : vector<16xf32>
    %22 = vector.multi_reduction <add>, %19, %cst_13 [1] : vector<16x64xf32> to vector<16xf32>
    %23 = vector.shape_cast %22 : vector<16xf32> to vector<16x1xf32>
    %cst_14 = arith.constant 6.400000e+01 : f32
    %24 = vector.broadcast %cst_14 : f32 to vector<16x1xf32>
    %25 = arith.divf %23, %24 : vector<16x1xf32>
    %26 = vector.broadcast %25 : vector<16x1xf32> to vector<16x64xf32>
    %27 = arith.subf %19, %26 : vector<16x64xf32>
    %28 = arith.mulf %27, %27 : vector<16x64xf32>
    %cst_15 = arith.constant dense<0.000000e+00> : vector<16xf32>
    %29 = vector.multi_reduction <add>, %28, %cst_15 [1] : vector<16x64xf32> to vector<16xf32>
    %30 = vector.shape_cast %29 : vector<16xf32> to vector<16x1xf32>
    %cst_16 = arith.constant 6.400000e+01 : f32
    %31 = vector.broadcast %cst_16 : f32 to vector<16x1xf32>
    %32 = arith.divf %30, %31 : vector<16x1xf32>
    %cst_17 = arith.constant 9.99999997E-7 : f32
    %33 = vector.broadcast %cst_17 : f32 to vector<16x1xf32>
    %34 = arith.addf %32, %33 : vector<16x1xf32>
    %35 = math.rsqrt %34 : vector<16x1xf32>
    %36 = vector.broadcast %35 : vector<16x1xf32> to vector<16x64xf32>
    %37 = arith.mulf %27, %36 : vector<16x64xf32>
    %38 = vector.broadcast %20 : vector<1x64xf32> to vector<16x64xf32>
    %39 = arith.mulf %37, %38 : vector<16x64xf32>
    %40 = vector.broadcast %21 : vector<1x64xf32> to vector<16x64xf32>
    %41 = arith.addf %39, %40 : vector<16x64xf32>
    %42 = arith.truncf %41 : vector<16x64xf32> to vector<16x64xbf16>
    %c0_18 = arith.constant 0 : index
    %c0_19 = arith.constant 0 : index
    %43 = vector.load %arg6[%c0_18, %c0_19] : memref<64x64xbf16, #tpu.memory_space<vmem>>, vector<64x64xbf16>
    %cst_20 = arith.constant dense<0.000000e+00> : vector<16x64xf32>
    %44 = tpu.matmul %42, %43, %cst_20 {dimension_numbers = #tpu.dot_dimension_numbers<[1], [0], [0], [1], [0, 0, 1, 1], [], []>} : vector<16x64xbf16>, vector<64x64xbf16>, vector<16x64xf32> -> vector<16x64xf32>
    %c0_21 = arith.constant 0 : index
    %c0_22 = arith.constant 0 : index
    %45 = vector.load %arg7[%c0_21, %c0_22] : memref<64x64xbf16, #tpu.memory_space<vmem>>, vector<64x64xbf16>
    %cst_23 = arith.constant dense<0.000000e+00> : vector<16x64xf32>
    %46 = tpu.matmul %42, %45, %cst_23 {dimension_numbers = #tpu.dot_dimension_numbers<[1], [0], [0], [1], [0, 0, 1, 1], [], []>} : vector<16x64xbf16>, vector<64x64xbf16>, vector<16x64xf32> -> vector<16x64xf32>
    %c0_24 = arith.constant 0 : index
    %c0_25 = arith.constant 0 : index
    %47 = vector.load %arg8[%c0_24, %c0_25] : memref<64x64xbf16, #tpu.memory_space<vmem>>, vector<64x64xbf16>
    %cst_26 = arith.constant dense<0.000000e+00> : vector<16x64xf32>
    %48 = tpu.matmul %42, %47, %cst_26 {dimension_numbers = #tpu.dot_dimension_numbers<[1], [0], [0], [1], [0, 0, 1, 1], [], []>} : vector<16x64xbf16>, vector<64x64xbf16>, vector<16x64xf32> -> vector<16x64xf32>
    %49 = vector.extract_strided_slice %44 {offsets = [0, 0], sizes = [8, 64], strides = [1, 1]} : vector<16x64xf32> to vector<8x64xf32>
    %50 = arith.truncf %49 : vector<8x64xf32> to vector<8x64xbf16>
    %51 = vector.extract_strided_slice %46 {offsets = [0, 0], sizes = [8, 64], strides = [1, 1]} : vector<16x64xf32> to vector<8x64xf32>
    %52 = arith.truncf %51 : vector<8x64xf32> to vector<8x64xbf16>
    %53 = vector.extract_strided_slice %48 {offsets = [0, 0], sizes = [8, 64], strides = [1, 1]} : vector<16x64xf32> to vector<8x64xf32>
    %54 = arith.truncf %53 : vector<8x64xf32> to vector<8x64xbf16>
    %cst_27 = arith.constant dense<0.000000e+00> : vector<8x8xf32>
    %55 = tpu.matmul %50, %52, %cst_27 {dimension_numbers = #tpu.dot_dimension_numbers<[1], [1], [0], [0], [0, 0, 1, 0], [], []>} : vector<8x64xbf16>, vector<8x64xbf16>, vector<8x8xf32> -> vector<8x8xf32>
    %cst_28 = arith.constant dense<0xFF800000> : vector<8xf32>
    %56 = vector.multi_reduction <maximumf>, %55, %cst_28 [1] : vector<8x8xf32> to vector<8xf32>
    %57 = vector.shape_cast %56 : vector<8xf32> to vector<8x1xf32>
    %58 = vector.broadcast %57 : vector<8x1xf32> to vector<8x8xf32>
    %59 = arith.subf %55, %58 : vector<8x8xf32>
    %60 = math.exp %59 : vector<8x8xf32>
    %cst_29 = arith.constant dense<0.000000e+00> : vector<8xf32>
    %61 = vector.multi_reduction <add>, %60, %cst_29 [1] : vector<8x8xf32> to vector<8xf32>
    %62 = vector.shape_cast %61 : vector<8xf32> to vector<8x1xf32>
    %63 = tpu.reciprocal %62 {approx = true} : vector<8x1xf32> -> vector<8x1xf32>
    %64 = vector.broadcast %63 : vector<8x1xf32> to vector<8x8xf32>
    %65 = arith.mulf %60, %64 : vector<8x8xf32>
    %66 = arith.truncf %65 : vector<8x8xf32> to vector<8x8xbf16>
    %cst_30 = arith.constant dense<0.000000e+00> : vector<8x64xf32>
    %67 = tpu.matmul %66, %54, %cst_30 {dimension_numbers = #tpu.dot_dimension_numbers<[1], [0], [0], [1], [0, 0, 1, 1], [], []>} : vector<8x8xbf16>, vector<8x64xbf16>, vector<8x64xf32> -> vector<8x64xf32>
    %c0_31 = arith.constant 0 : index
    %c0_32 = arith.constant 0 : index
    %68 = vector.load %arg15[%c0_31, %c0_32] : memref<16x64xf32, #tpu.memory_space<vmem>>, vector<8x64xf32>
    tpu.vector_store %arg15[%c0_31, %c0_32], %67 {strides = array<i32>} : memref<16x64xf32, #tpu.memory_space<vmem>>, vector<8x64xf32>,
    %69 = vector.extract_strided_slice %44 {offsets = [8, 0], sizes = [8, 64], strides = [1, 1]} : vector<16x64xf32> to vector<8x64xf32>
    %70 = arith.truncf %69 : vector<8x64xf32> to vector<8x64xbf16>
    %71 = vector.extract_strided_slice %46 {offsets = [8, 0], sizes = [8, 64], strides = [1, 1]} : vector<16x64xf32> to vector<8x64xf32>
    %72 = arith.truncf %71 : vector<8x64xf32> to vector<8x64xbf16>
    %73 = vector.extract_strided_slice %48 {offsets = [8, 0], sizes = [8, 64], strides = [1, 1]} : vector<16x64xf32> to vector<8x64xf32>
    %74 = arith.truncf %73 : vector<8x64xf32> to vector<8x64xbf16>
    %cst_33 = arith.constant dense<0.000000e+00> : vector<8x8xf32>
    %75 = tpu.matmul %70, %72, %cst_33 {dimension_numbers = #tpu.dot_dimension_numbers<[1], [1], [0], [0], [0, 0, 1, 0], [], []>} : vector<8x64xbf16>, vector<8x64xbf16>, vector<8x8xf32> -> vector<8x8xf32>
    %cst_34 = arith.constant dense<0xFF800000> : vector<8xf32>
    %76 = vector.multi_reduction <maximumf>, %75, %cst_34 [1] : vector<8x8xf32> to vector<8xf32>
    %77 = vector.shape_cast %76 : vector<8xf32> to vector<8x1xf32>
    %78 = vector.broadcast %77 : vector<8x1xf32> to vector<8x8xf32>
    %79 = arith.subf %75, %78 : vector<8x8xf32>
    %80 = math.exp %79 : vector<8x8xf32>
    %cst_35 = arith.constant dense<0.000000e+00> : vector<8xf32>
    %81 = vector.multi_reduction <add>, %80, %cst_35 [1] : vector<8x8xf32> to vector<8xf32>
    %82 = vector.shape_cast %81 : vector<8xf32> to vector<8x1xf32>
    %83 = tpu.reciprocal %82 {approx = true} : vector<8x1xf32> -> vector<8x1xf32>
    %84 = vector.broadcast %83 : vector<8x1xf32> to vector<8x8xf32>
    %85 = arith.mulf %80, %84 : vector<8x8xf32>
    %86 = arith.truncf %85 : vector<8x8xf32> to vector<8x8xbf16>
    %cst_36 = arith.constant dense<0.000000e+00> : vector<8x64xf32>
    %87 = tpu.matmul %86, %74, %cst_36 {dimension_numbers = #tpu.dot_dimension_numbers<[1], [0], [0], [1], [0, 0, 1, 1], [], []>} : vector<8x8xbf16>, vector<8x64xbf16>, vector<8x64xf32> -> vector<8x64xf32>
    %c8 = arith.constant 8 : index
    %c0_37 = arith.constant 0 : index
    %88 = vector.load %arg15[%c8, %c0_37] : memref<16x64xf32, #tpu.memory_space<vmem>>, vector<8x64xf32>
    tpu.vector_store %arg15[%c8, %c0_37], %87 {strides = array<i32>} : memref<16x64xf32, #tpu.memory_space<vmem>>, vector<8x64xf32>,
    %c0_38 = arith.constant 0 : index
    %c0_39 = arith.constant 0 : index
    %89 = vector.load %arg15[%c0_38, %c0_39] : memref<16x64xf32, #tpu.memory_space<vmem>>, vector<16x64xf32>
    %90 = arith.truncf %89 : vector<16x64xf32> to vector<16x64xbf16>
    %c0_40 = arith.constant 0 : index
    %c0_41 = arith.constant 0 : index
    %91 = vector.load %arg9[%c0_40, %c0_41] : memref<64x64xbf16, #tpu.memory_space<vmem>>, vector<64x64xbf16>
    %cst_42 = arith.constant dense<0.000000e+00> : vector<16x64xf32>
    %92 = tpu.matmul %90, %91, %cst_42 {dimension_numbers = #tpu.dot_dimension_numbers<[1], [0], [0], [1], [0, 0, 1, 1], [], []>} : vector<16x64xbf16>, vector<64x64xbf16>, vector<16x64xf32> -> vector<16x64xf32>
    %c0_43 = arith.constant 0 : index
    %c0_44 = arith.constant 0 : index
    %93 = vector.load %arg10[%c0_43, %c0_44] : memref<1x64xf32, #tpu.memory_space<vmem>>, vector<1x64xf32>
    %94 = vector.broadcast %93 : vector<1x64xf32> to vector<16x64xf32>
    %95 = arith.addf %92, %94 : vector<16x64xf32>
    %96 = arith.addf %19, %95 : vector<16x64xf32>
    %c0_45 = arith.constant 0 : index
    %c0_46 = arith.constant 0 : index
    %97 = vector.load %arg11[%c0_45, %c0_46] : memref<1x64xf32, #tpu.memory_space<vmem>>, vector<1x64xf32>
    %c0_47 = arith.constant 0 : index
    %c0_48 = arith.constant 0 : index
    %98 = vector.load %arg12[%c0_47, %c0_48] : memref<1x64xf32, #tpu.memory_space<vmem>>, vector<1x64xf32>
    %cst_49 = arith.constant dense<0.000000e+00> : vector<16xf32>
    %99 = vector.multi_reduction <add>, %96, %cst_49 [1] : vector<16x64xf32> to vector<16xf32>
    %100 = vector.shape_cast %99 : vector<16xf32> to vector<16x1xf32>
    %cst_50 = arith.constant 6.400000e+01 : f32
    %101 = vector.broadcast %cst_50 : f32 to vector<16x1xf32>
    %102 = arith.divf %100, %101 : vector<16x1xf32>
    %103 = vector.broadcast %102 : vector<16x1xf32> to vector<16x64xf32>
    %104 = arith.subf %96, %103 : vector<16x64xf32>
    %105 = arith.mulf %104, %104 : vector<16x64xf32>
    %cst_51 = arith.constant dense<0.000000e+00> : vector<16xf32>
    %106 = vector.multi_reduction <add>, %105, %cst_51 [1] : vector<16x64xf32> to vector<16xf32>
    %107 = vector.shape_cast %106 : vector<16xf32> to vector<16x1xf32>
    %cst_52 = arith.constant 6.400000e+01 : f32
    %108 = vector.broadcast %cst_52 : f32 to vector<16x1xf32>
    %109 = arith.divf %107, %108 : vector<16x1xf32>
    %cst_53 = arith.constant 9.99999997E-7 : f32
    %110 = vector.broadcast %cst_53 : f32 to vector<16x1xf32>
    %111 = arith.addf %109, %110 : vector<16x1xf32>
    %112 = math.rsqrt %111 : vector<16x1xf32>
    %113 = vector.broadcast %112 : vector<16x1xf32> to vector<16x64xf32>
    %114 = arith.mulf %104, %113 : vector<16x64xf32>
    %115 = vector.broadcast %97 : vector<1x64xf32> to vector<16x64xf32>
    %116 = arith.mulf %114, %115 : vector<16x64xf32>
    %117 = vector.broadcast %98 : vector<1x64xf32> to vector<16x64xf32>
    %118 = arith.addf %116, %117 : vector<16x64xf32>
    %119 = arith.truncf %118 : vector<16x64xf32> to vector<16x64xbf16>
    %c0_54 = arith.constant 0 : index
    %c0_55 = arith.constant 0 : index
    %120 = vector.load %arg13[%c0_54, %c0_55] : memref<64x32xbf16, #tpu.memory_space<vmem>>, vector<64x32xbf16>
    %cst_56 = arith.constant dense<0.000000e+00> : vector<16x32xf32>
    %121 = tpu.matmul %119, %120, %cst_56 {dimension_numbers = #tpu.dot_dimension_numbers<[1], [0], [0], [1], [0, 0, 1, 1], [], []>} : vector<16x64xbf16>, vector<64x32xbf16>, vector<16x32xf32> -> vector<16x32xf32>
    %cst_57 = arith.constant 5.000000e-01 : f32
    %122 = vector.broadcast %cst_57 : f32 to vector<16x32xf32>
    %123 = arith.mulf %122, %121 : vector<16x32xf32>
    %124 = arith.mulf %121, %121 : vector<16x32xf32>
    %125 = arith.mulf %124, %121 : vector<16x32xf32>
    %cst_58 = arith.constant 4.471500e-02 : f32
    %126 = vector.broadcast %cst_58 : f32 to vector<16x32xf32>
    %127 = arith.mulf %126, %125 : vector<16x32xf32>
    %128 = arith.addf %121, %127 : vector<16x32xf32>
    %cst_59 = arith.constant 0.797884583 : f32
    %129 = vector.broadcast %cst_59 : f32 to vector<16x32xf32>
    %130 = arith.mulf %129, %128 : vector<16x32xf32>
    %131 = math.tanh %130 : vector<16x32xf32>
    %cst_60 = arith.constant 1.000000e+00 : f32
    %132 = vector.broadcast %cst_60 : f32 to vector<16x32xf32>
    %133 = arith.addf %132, %131 : vector<16x32xf32>
    %134 = arith.mulf %123, %133 : vector<16x32xf32>
    %135 = arith.addf %0, %134 : vector<16x32xf32>
    %c0_61 = arith.constant 0 : index
    %c0_62 = arith.constant 0 : index
    %136 = vector.load %arg14[%c0_61, %c0_62] : memref<16x32xf32, #tpu.memory_space<vmem>>, vector<16x32xf32>
    tpu.vector_store %arg14[%c0_61, %c0_62], %135 {strides = array<i32>} : memref<16x32xf32, #tpu.memory_space<vmem>>, vector<16x32xf32>,
    return
  }
  func.func @transform_0(%arg0: i32) -> (i32, i32) {
    %c0_i32 = arith.constant 0 : i32
    %c0_i32_0 = arith.constant 0 : i32
    return %arg0, %c0_i32 : i32, i32
  }
  func.func @transform_1(%arg0: i32) -> (i32, i32) {
    %c0_i32 = arith.constant 0 : i32
    %c0_i32_0 = arith.constant 0 : i32
    %c0_i32_1 = arith.constant 0 : i32
    return %c0_i32, %c0_i32_0 : i32, i32
  }
  func.func @transform_2(%arg0: i32) -> (i32, i32) {
    %c0_i32 = arith.constant 0 : i32
    %c0_i32_0 = arith.constant 0 : i32
    %c0_i32_1 = arith.constant 0 : i32
    return %c0_i32, %c0_i32_0 : i32, i32
  }
  func.func @transform_3(%arg0: i32) -> (i32, i32) {
    %c0_i32 = arith.constant 0 : i32
    %c0_i32_0 = arith.constant 0 : i32
    %c0_i32_1 = arith.constant 0 : i32
    return %c0_i32, %c0_i32_0 : i32, i32
  }
  func.func @transform_4(%arg0: i32) -> (i32, i32) {
    %c0_i32 = arith.constant 0 : i32
    %c0_i32_0 = arith.constant 0 : i32
    %c0_i32_1 = arith.constant 0 : i32
    return %c0_i32, %c0_i32_0 : i32, i32
  }
  func.func @transform_5(%arg0: i32) -> (i32, i32) {
    %c0_i32 = arith.constant 0 : i32
    %c0_i32_0 = arith.constant 0 : i32
    %c0_i32_1 = arith.constant 0 : i32
    return %c0_i32, %c0_i32_0 : i32, i32
  }
  func.func @transform_6(%arg0: i32) -> (i32, i32) {
    %c0_i32 = arith.constant 0 : i32
    %c0_i32_0 = arith.constant 0 : i32
    %c0_i32_1 = arith.constant 0 : i32
    return %c0_i32, %c0_i32_0 : i32, i32
  }
  func.func @transform_7(%arg0: i32) -> (i32, i32) {
    %c0_i32 = arith.constant 0 : i32
    %c0_i32_0 = arith.constant 0 : i32
    %c0_i32_1 = arith.constant 0 : i32
    return %c0_i32, %c0_i32_0 : i32, i32
  }
  func.func @transform_8(%arg0: i32) -> (i32, i32) {
    %c0_i32 = arith.constant 0 : i32
    %c0_i32_0 = arith.constant 0 : i32
    %c0_i32_1 = arith.constant 0 : i32
    return %c0_i32, %c0_i32_0 : i32, i32
  }
  func.func @transform_9(%arg0: i32) -> (i32, i32) {
    %c0_i32 = arith.constant 0 : i32
    %c0_i32_0 = arith.constant 0 : i32
    %c0_i32_1 = arith.constant 0 : i32
    return %c0_i32, %c0_i32_0 : i32, i32
  }
  func.func @transform_10(%arg0: i32) -> (i32, i32) {
    %c0_i32 = arith.constant 0 : i32
    %c0_i32_0 = arith.constant 0 : i32
    %c0_i32_1 = arith.constant 0 : i32
    return %c0_i32, %c0_i32_0 : i32, i32
  }
  func.func @transform_11(%arg0: i32) -> (i32, i32) {
    %c0_i32 = arith.constant 0 : i32
    %c0_i32_0 = arith.constant 0 : i32
    %c0_i32_1 = arith.constant 0 : i32
    return %c0_i32, %c0_i32_0 : i32, i32
  }
  func.func @transform_12(%arg0: i32) -> (i32, i32) {
    %c0_i32 = arith.constant 0 : i32
    %c0_i32_0 = arith.constant 0 : i32
    %c0_i32_1 = arith.constant 0 : i32
    return %c0_i32, %c0_i32_0 : i32, i32
  }
  func.func @transform_13(%arg0: i32) -> (i32, i32) {
    %c0_i32 = arith.constant 0 : i32
    %c0_i32_0 = arith.constant 0 : i32
    return %arg0, %c0_i32 : i32, i32
  }
}

</mosaic_0001>

<llo_original>
// kernel: tpu_custom_call.1
$region0: #{tpu_custom_call.1}
  #allocation0 [shape = 'u32[]', space=smem, size = 0x4, offset = 0x4, fixed_abs, tag = 'smem constant byte address 0x4 - core index']
  #allocation1 [shape = 'u32[144,128]{1,0:T(1,128)}', space=vmem, size = 0x12000, scoped, tag = 'internal scratch']
  #allocation2 [shape = 'f32[16,64]{1,0:T(8,128)}', space=vmem, size = 0x2000, scoped, tag = 'scratch operand']
  %s0 = inlined_call_operand.hbm [shape: f32[16,32], index: 0, kind: input, shape index: {}]
  %s1 = inlined_call_operand.hbm [shape: bf16[32,64], index: 1, kind: input, shape index: {}]
  %s2 = inlined_call_operand.vmem [shape: f32[1,64], index: 2, kind: input, shape index: {}]
  %s3 = inlined_call_operand.vmem [shape: f32[1,64], index: 3, kind: input, shape index: {}]
  %s4 = inlined_call_operand.hbm [shape: f32[1,64], index: 4, kind: input, shape index: {}]
  %s5 = inlined_call_operand.vmem [shape: bf16[64,64], index: 5, kind: input, shape index: {}]
  %s6 = inlined_call_operand.vmem [shape: bf16[64,64], index: 6, kind: input, shape index: {}]
  %s7 = inlined_call_operand.hbm [shape: bf16[64,64], index: 7, kind: input, shape index: {}]
  %s8 = inlined_call_operand.hbm [shape: bf16[64,64], index: 8, kind: input, shape index: {}]
  %s9 = inlined_call_operand.hbm [shape: f32[1,64], index: 9, kind: input, shape index: {}]
  %s10 = inlined_call_operand.vmem [shape: f32[1,64], index: 10, kind: input, shape index: {}]
  %s11 = inlined_call_operand.vmem [shape: f32[1,64], index: 11, kind: input, shape index: {}]
  %s12 = inlined_call_operand.vmem [shape: bf16[64,32], index: 12, kind: input, shape index: {}]
  %s13 = inlined_call_operand.hbm [shape: f32[16,32], index: 13, kind: output, shape index: {}]
  %s14 = sld [smem:[#allocation0]]
  $region86: #{tpu_custom_call.1} parent=0
    _
  %s16 = ssub.s32 1, %s14
  %s17 = scalar_select 0, %s16, %s14
  $region1: #{tpu_custom_call.1} parent=0
    #allocation3 [shape = 'u8[8192]{0}', space=vmem, size = 0x2000, scoped, tag = 'input window, operand 0, single buffered']
    #allocation4 [shape = 's32[1]{0}', space=sflag, size = 0x4, scoped, tag = 'scoped memory for tpu_custom_call.1']
    #allocation5 [shape = 's32[1]{0}', space=sflag, size = 0x4, scoped, tag = 'scoped memory for tpu_custom_call.1']
    #allocation6 [shape = 'u8[8192]{0}', space=vmem, size = 0x2000, scoped, tag = 'input window, operand 1, single buffered']
    #allocation7 [shape = 's32[1]{0}', space=sflag, size = 0x4, scoped, tag = 'scoped memory for tpu_custom_call.1']
    #allocation8 [shape = 'u8[512]{0}', space=vmem, size = 0x400, scoped, tag = 'input window, operand 4, single buffered']
    #allocation9 [shape = 'u8[16384]{0}', space=vmem, size = 0x4000, scoped, tag = 'input window, operand 7, single buffered']
    #allocation10 [shape = 's32[1]{0}', space=sflag, size = 0x4, scoped, tag = 'scoped memory for tpu_custom_call.1']
    #allocation11 [shape = 'u8[16384]{0}', space=vmem, size = 0x4000, scoped, tag = 'input window, operand 8, single buffered']
    #allocation12 [shape = 'u8[512]{0}', space=vmem, size = 0x400, scoped, tag = 'input window, operand 9, single buffered']
    #allocation13 [shape = 's32[1]{0}', space=sflag, size = 0x4, scoped, tag = 'scoped memory for tpu_custom_call.1']
    #allocation14 [shape = 'u8[8192]{0}', space=vmem, size = 0x2000, scoped, tag = 'output window, operand 0, single buffered']
    %18 = vsyncpa [#allocation4], 0
    %19 = vsyncpa [#allocation7], 0
    %20 = vsyncpa [#allocation10], 0
    %21 = vsyncpa [#allocation13], 0
    %22 = vsyncpa [#allocation5], 0
    // Predicated region
    $region2: #{tpu_custom_call.1} parent=1 // pred_check
      _
    $region3: #{tpu_custom_call.1} parent=1 // pred_check_branch
      %24 = sbr.rel (0) target = $region5
    $region4: #{tpu_custom_call.1} parent=1 // pred_region
      %s26 = ssub.s32 256, 256
      %27 = vsyncadd [#allocation4], %s26
      %s28 = sshll.u32 [#allocation3], 4
      %s29 = int_to_ptr.vmem [resolvable:$true] %s28
      %34 = dma.hbm_to_vmem [thread:$0]  %s0, 256, %s29, [#allocation4], 128, 128, 8
    $region5: #{tpu_custom_call.1} parent=1 // pred_fallthru
      _
    // Predicated region
    $region6: #{tpu_custom_call.1} parent=1 // pred_check
      _
    $region7: #{tpu_custom_call.1} parent=1 // pred_check_branch
      %36 = sbr.rel (0) target = $region9
    $region8: #{tpu_custom_call.1} parent=1 // pred_region
      %s38 = ssub.s32 256, 256
      %39 = vsyncadd [#allocation7], %s38
      %s40 = sshll.u32 [#allocation6], 4
      %s41 = int_to_ptr.vmem [resolvable:$true] %s40
      %46 = dma.hbm_to_vmem [thread:$0]  %s1, 256, %s41, [#allocation7], 64, 64, 4
    $region9: #{tpu_custom_call.1} parent=1 // pred_fallthru
      _
    // Predicated region
    $region10: #{tpu_custom_call.1} parent=1 // pred_check
      _
    $region11: #{tpu_custom_call.1} parent=1 // pred_check_branch
      %48 = sbr.rel (0) target = $region13
    $region12: #{tpu_custom_call.1} parent=1 // pred_region
      _
    $region13: #{tpu_custom_call.1} parent=1 // pred_fallthru
      _
    // Predicated region
    $region14: #{tpu_custom_call.1} parent=1 // pred_check
      _
    $region15: #{tpu_custom_call.1} parent=1 // pred_check_branch
      %50 = sbr.rel (0) target = $region17
    $region16: #{tpu_custom_call.1} parent=1 // pred_region
      _
    $region17: #{tpu_custom_call.1} parent=1 // pred_fallthru
      _
    // Predicated region
    $region18: #{tpu_custom_call.1} parent=1 // pred_check
      _
    $region19: #{tpu_custom_call.1} parent=1 // pred_check_branch
      %52 = sbr.rel (0) target = $region21
    $region20: #{tpu_custom_call.1} parent=1 // pred_region
      %s54 = ssub.s32 16, 16
      %55 = vsyncadd [#allocation7], %s54
      %s57 = sshll.u32 [#allocation8], 4
      %s58 = int_to_ptr.vmem [resolvable:$true] %s57
      %60 = dma.hbm_to_vmem [thread:$0]  %s4, 16, %s58, [#allocation7]
    $region21: #{tpu_custom_call.1} parent=1 // pred_fallthru
      _
    // Predicated region
    $region22: #{tpu_custom_call.1} parent=1 // pred_check
      _
    $region23: #{tpu_custom_call.1} parent=1 // pred_check_branch
      %62 = sbr.rel (0) target = $region25
    $region24: #{tpu_custom_call.1} parent=1 // pred_region
      _
    $region25: #{tpu_custom_call.1} parent=1 // pred_fallthru
      _
    // Predicated region
    $region26: #{tpu_custom_call.1} parent=1 // pred_check
      _
    $region27: #{tpu_custom_call.1} parent=1 // pred_check_branch
      %64 = sbr.rel (0) target = $region29
    $region28: #{tpu_custom_call.1} parent=1 // pred_region
      _
    $region29: #{tpu_custom_call.1} parent=1 // pred_fallthru
      _
    // Predicated region
    $region30: #{tpu_custom_call.1} parent=1 // pred_check
      _
    $region31: #{tpu_custom_call.1} parent=1 // pred_check_branch
      %66 = sbr.rel (0) target = $region33
    $region32: #{tpu_custom_call.1} parent=1 // pred_region
      %s68 = ssub.s32 512, 512
      %69 = vsyncadd [#allocation10], %s68
      %s70 = sshll.u32 [#allocation9], 4
      %s71 = int_to_ptr.vmem [resolvable:$true] %s70
      %76 = dma.hbm_to_vmem [thread:$0]  %s7, 512, %s71, [#allocation10], 64, 64, 4
    $region33: #{tpu_custom_call.1} parent=1 // pred_fallthru
      _
    // Predicated region
    $region34: #{tpu_custom_call.1} parent=1 // pred_check
      _
    $region35: #{tpu_custom_call.1} parent=1 // pred_check_branch
      %78 = sbr.rel (0) target = $region37
    $region36: #{tpu_custom_call.1} parent=1 // pred_region
      %s80 = ssub.s32 512, 512
      %81 = vsyncadd [#allocation10], %s80
      %s82 = sshll.u32 [#allocation11], 4
      %s83 = int_to_ptr.vmem [resolvable:$true] %s82
      %88 = dma.hbm_to_vmem [thread:$0]  %s8, 512, %s83, [#allocation10], 64, 64, 4
    $region37: #{tpu_custom_call.1} parent=1 // pred_fallthru
      _
    // Predicated region
    $region38: #{tpu_custom_call.1} parent=1 // pred_check
      _
    $region39: #{tpu_custom_call.1} parent=1 // pred_check_branch
      %90 = sbr.rel (0) target = $region41
    $region40: #{tpu_custom_call.1} parent=1 // pred_region
      %s92 = ssub.s32 16, 16
      %93 = vsyncadd [#allocation13], %s92
      %s95 = sshll.u32 [#allocation12], 4
      %s96 = int_to_ptr.vmem [resolvable:$true] %s95
      %98 = dma.hbm_to_vmem [thread:$0]  %s9, 16, %s96, [#allocation13]
    $region41: #{tpu_custom_call.1} parent=1 // pred_fallthru
      _
    // Predicated region
    $region42: #{tpu_custom_call.1} parent=1 // pred_check
      _
    $region43: #{tpu_custom_call.1} parent=1 // pred_check_branch
      %100 = sbr.rel (0) target = $region45
    $region44: #{tpu_custom_call.1} parent=1 // pred_region
      _
    $region45: #{tpu_custom_call.1} parent=1 // pred_fallthru
      _
    // Predicated region
    $region46: #{tpu_custom_call.1} parent=1 // pred_check
      _
    $region47: #{tpu_custom_call.1} parent=1 // pred_check_branch
      %102 = sbr.rel (0) target = $region49
    $region48: #{tpu_custom_call.1} parent=1 // pred_region
      _
    $region49: #{tpu_custom_call.1} parent=1 // pred_fallthru
      _
    // Predicated region
    $region50: #{tpu_custom_call.1} parent=1 // pred_check
      _
    $region51: #{tpu_custom_call.1} parent=1 // pred_check_branch
      %104 = sbr.rel (0) target = $region53
    $region52: #{tpu_custom_call.1} parent=1 // pred_region
      _
    $region53: #{tpu_custom_call.1} parent=1 // pred_fallthru
      _
    // Predicated region
    $region54: #{tpu_custom_call.1} parent=1 // pred_check
      _
    $region55: #{tpu_custom_call.1} parent=1 // pred_check_branch
      %106 = sbr.rel (0) target = $region57
    $region56: #{tpu_custom_call.1} parent=1 // pred_region
      %107 = dma.done [#allocation4], 256
    $region57: #{tpu_custom_call.1} parent=1 // pred_fallthru
      _
    // Predicated region
    $region58: #{tpu_custom_call.1} parent=1 // pred_check
      _
    $region59: #{tpu_custom_call.1} parent=1 // pred_check_branch
      %109 = sbr.rel (0) target = $region61
    $region60: #{tpu_custom_call.1} parent=1 // pred_region
      %110 = dma.done [#allocation7], 256
    $region61: #{tpu_custom_call.1} parent=1 // pred_fallthru
      _
    // Predicated region
    $region62: #{tpu_custom_call.1} parent=1 // pred_check
      _
    $region63: #{tpu_custom_call.1} parent=1 // pred_check_branch
      %112 = sbr.rel (0) target = $region65
    $region64: #{tpu_custom_call.1} parent=1 // pred_region
      %113 = dma.done [#allocation7], 16
    $region65: #{tpu_custom_call.1} parent=1 // pred_fallthru
      _
    // Predicated region
    $region66: #{tpu_custom_call.1} parent=1 // pred_check
      _
    $region67: #{tpu_custom_call.1} parent=1 // pred_check_branch
      %115 = sbr.rel (0) target = $region69
    $region68: #{tpu_custom_call.1} parent=1 // pred_region
      %116 = dma.done [#allocation10], 512
    $region69: #{tpu_custom_call.1} parent=1 // pred_fallthru
      _
    // Predicated region
    $region70: #{tpu_custom_call.1} parent=1 // pred_check
      _
    $region71: #{tpu_custom_call.1} parent=1 // pred_check_branch
      %118 = sbr.rel (0) target = $region73
    $region72: #{tpu_custom_call.1} parent=1 // pred_region
      %119 = dma.done [#allocation10], 512
    $region73: #{tpu_custom_call.1} parent=1 // pred_fallthru
      _
    // Predicated region
    $region74: #{tpu_custom_call.1} parent=1 // pred_check
      _
    $region75: #{tpu_custom_call.1} parent=1 // pred_check_branch
      %121 = sbr.rel (0) target = $region77
    $region76: #{tpu_custom_call.1} parent=1 // pred_region
      %122 = dma.done [#allocation13], 16
    $region77: #{tpu_custom_call.1} parent=1 // pred_fallthru
      _
    %v124 = vld [vmem:[#allocation3] sm:$0xff]
    %v125 = vld [vmem:[#allocation3 + $0x8] sm:$0xff]
    %v126 = vpack.c.bf16 %v125, %v124
    %v127 = vld [vmem:[#allocation6] sm:$0xf]
    %v128 = vld [vmem:[#allocation6 + $0x4] sm:$0xf]
    %v129 = vld [vmem:[#allocation6 + $0x8] sm:$0xf]
    %v130 = vld [vmem:[#allocation6 + $0xc] sm:$0xf]
    %v131 = vld [vmem:[%s2] sm:$0x1]
    %v133 = vlaneseq
    %v134 = vshrl.u32 %v133, 7
    %v135 = vsub.s32 0, %v134
    %v136 = vrot.slane %v131, %v135
    %v142 = vunpack.c.l.b16 %v127
    %v143 = vunpack.c.l.b16 %v128
    %v144 = vunpack.c.l.b16 %v129
    %v145 = vunpack.c.l.b16 %v130
    %v146 = vpack.c.b16 %v143, %v142
    %v147 = vpack.c.b16 %v145, %v144
    %vm150 = vcmask 261120
    %v152 = vsel %vm150, %v126, 0
    %154 = vmatprep.subr.bf16.mxu0 0
    %155 = vmatpush1.bf16.msra.mxu0 %v146
    %156 = vmatprep.subr.bf16.mxu0 0
    %157 = vmatpush1.bf16.msra.mxu0 %v147
    %158 = vmatprep.subr.bf16.mxu0 0
    %159 = vmatpush1.bf16.msra.mxu0 0
    %160 = vmatprep.subr.bf16.mxu0 0
    %161 = vmatpush1.bf16.msra.mxu0 0
    %162 = vmatprep.subr.bf16.mxu0 0
    %163 = vmatpush1.bf16.msra.mxu0 0
    %164 = vmatprep.subr.bf16.mxu0 0
    %165 = vmatpush1.bf16.msra.mxu0 0
    %166 = vmatprep.subr.bf16.mxu0 0
    %167 = vmatpush1.bf16.msra.mxu0 0
    %168 = vmatprep.subr.bf16.mxu0 0
    %169 = vmatpush1.bf16.msra.mxu0 0
    %170 = vmatprep.subr.bf16.mxu0 0
    %171 = vmatpush1.bf16.msra.mxu0 0
    %172 = vmatprep.subr.bf16.mxu0 0
    %173 = vmatpush1.bf16.msra.mxu0 0
    %174 = vmatprep.subr.bf16.mxu0 0
    %175 = vmatpush1.bf16.msra.mxu0 0
    %176 = vmatprep.subr.bf16.mxu0 0
    %177 = vmatpush1.bf16.msra.mxu0 0
    %178 = vmatprep.subr.bf16.mxu0 0
    %179 = vmatpush1.bf16.msra.mxu0 0
    %180 = vmatprep.subr.bf16.mxu0 0
    %181 = vmatpush1.bf16.msra.mxu0 0
    %182 = vmatprep.subr.bf16.mxu0 0
    %183 = vmatpush1.bf16.msra.mxu0 0
    %184 = vmatprep.subr.bf16.mxu0 0
    %185 = vmatpush1.bf16.msra.mxu0 0
    %186 = vmatprep.mubr.bf16.mxu0 0
    %187 = vmatmul.mubr.bf16.gmra.mrb[0].mxu0 %v152
    %v188 = vpop.f32.mrb[0].mxu0
    %v189 = vadd.f32 %v136, %v188
    %v190 = vpop.f32.mrb[0].mxu0
    %v191 = vpop.f32.mrb[0].mxu0
    %v192 = vadd.f32 %v136, %v191
    %v193 = vpop.f32.mrb[0].mxu0
    %194 = vdwg.mxu0
    %v195 = vmul.f32 %v189, 0.5
    %v196 = vmul.f32 %v192, 0.5
    %v197 = vmul.f32 %v189, %v189
    %v198 = vmul.f32 %v192, %v192
    %v199 = vmul.f32 %v197, %v189
    %v200 = vmul.f32 %v198, %v192
    %v201 = vmul.f32 %v199, 0.044715
    %v202 = vmul.f32 %v200, 0.044715
    %v203 = vadd.f32 %v189, %v201
    %v204 = vadd.f32 %v192, %v202
    %v205 = vmul.f32 %v203, 0.7978846
    %v206 = vmul.f32 %v204, 0.7978846
    %v207 = vtanh.pop %v205
    %v208 = vtanh.pop %v206
    %v209 = vadd.f32 %v207, 1.0
    %v210 = vadd.f32 %v208, 1.0
    %v211 = vmul.f32 %v195, %v209
    %v212 = vmul.f32 %v196, %v210
    %v213 = vld [vmem:[%s3] sm:$0x1]
    %v214 = vld [vmem:[#allocation8] sm:$0x1]
    %vm215 = vcmask 523264
    %v216 = vsel %vm215, %v211, 0.0
    %217 = vadd.xlane.f32.xlu0 %v216
    %v218 = vpop.xlane.xlu0 %217
    %v219 = vsel %vm215, %v212, 0.0
    %220 = vadd.xlane.f32.xlu0 %v219
    %v221 = vpop.xlane.xlu0 %220
    %v222 = vrcp.pop 64.0
    %v223 = vmul.f32 %v218, %v222
    %v224 = vmul.f32 %v221, %v222
    %v225 = vsub.f32 %v211, %v223
    %v226 = vsub.f32 %v212, %v224
    %v227 = vmul.f32 %v225, %v225
    %v228 = vmul.f32 %v226, %v226
    %v229 = vsel %vm215, %v227, 0.0
    %230 = vadd.xlane.f32.xlu0 %v229
    %v231 = vpop.xlane.xlu0 %230
    %v232 = vsel %vm215, %v228, 0.0
    %233 = vadd.xlane.f32.xlu0 %v232
    %v234 = vpop.xlane.xlu0 %233
    %v235 = vmul.f32 %v231, %v222
    %v236 = vmul.f32 %v234, %v222
    %v237 = vadd.f32 %v235, 1e-06
    %v238 = vadd.f32 %v236, 1e-06
    %v239 = vrsqrt.pop %v237
    %v240 = vrsqrt.pop %v238
    %v241 = vmul.f32 %v225, %v239
    %v242 = vmul.f32 %v226, %v240
    %v244 = vlaneseq
    %v245 = vshrl.u32 %v244, 7
    %v246 = vsub.s32 0, %v245
    %v247 = vrot.slane %v213, %v246
    %v249 = vmul.f32 %v241, %v247
    %v250 = vmul.f32 %v242, %v247
    %v252 = vlaneseq
    %v253 = vshrl.u32 %v252, 7
    %v254 = vsub.s32 0, %v253
    %v255 = vrot.slane %v214, %v254
    %v257 = vadd.f32 %v249, %v255
    %v258 = vadd.f32 %v250, %v255
    %v259 = vpack.c.bf16 %v258, %v257
    %v260 = vld [vmem:[%s5] sm:$0xf]
    %v261 = vld [vmem:[%s5 + $0x4] sm:$0xf]
    %v262 = vld [vmem:[%s5 + $0x8] sm:$0xf]
    %v263 = vld [vmem:[%s5 + $0xc] sm:$0xf]
    %v264 = vld [vmem:[%s5 + $0x10] sm:$0xf]
    %v265 = vld [vmem:[%s5 + $0x14] sm:$0xf]
    %v266 = vld [vmem:[%s5 + $0x18] sm:$0xf]
    %v267 = vld [vmem:[%s5 + $0x1c] sm:$0xf]
    %v276 = vunpack.c.l.b16 %v260
    %v277 = vunpack.c.l.b16 %v261
    %v278 = vunpack.c.l.b16 %v262
    %v279 = vunpack.c.l.b16 %v263
    %v280 = vunpack.c.l.b16 %v264
    %v281 = vunpack.c.l.b16 %v265
    %v282 = vunpack.c.l.b16 %v266
    %v283 = vunpack.c.l.b16 %v267
    %v284 = vpack.c.b16 %v277, %v276
    %v285 = vpack.c.b16 %v279, %v278
    %v286 = vpack.c.b16 %v281, %v280
    %v287 = vpack.c.b16 %v283, %v282
    %v293 = vsel %vm215, %v259, 0
    %295 = vmatprep.subr.bf16.mxu0 0
    %296 = vmatpush1.bf16.msra.mxu0 %v284
    %297 = vmatprep.subr.bf16.mxu0 0
    %298 = vmatpush1.bf16.msra.mxu0 %v285
    %299 = vmatprep.subr.bf16.mxu0 0
    %300 = vmatpush1.bf16.msra.mxu0 %v286
    %301 = vmatprep.subr.bf16.mxu0 0
    %302 = vmatpush1.bf16.msra.mxu0 %v287
    %303 = vmatprep.subr.bf16.mxu0 0
    %304 = vmatpush1.bf16.msra.mxu0 0
    %305 = vmatprep.subr.bf16.mxu0 0
    %306 = vmatpush1.bf16.msra.mxu0 0
    %307 = vmatprep.subr.bf16.mxu0 0
    %308 = vmatpush1.bf16.msra.mxu0 0
    %309 = vmatprep.subr.bf16.mxu0 0
    %310 = vmatpush1.bf16.msra.mxu0 0
    %311 = vmatprep.subr.bf16.mxu0 0
    %312 = vmatpush1.bf16.msra.mxu0 0
    %313 = vmatprep.subr.bf16.mxu0 0
    %314 = vmatpush1.bf16.msra.mxu0 0
    %315 = vmatprep.subr.bf16.mxu0 0
    %316 = vmatpush1.bf16.msra.mxu0 0
    %317 = vmatprep.subr.bf16.mxu0 0
    %318 = vmatpush1.bf16.msra.mxu0 0
    %319 = vmatprep.subr.bf16.mxu0 0
    %320 = vmatpush1.bf16.msra.mxu0 0
    %321 = vmatprep.subr.bf16.mxu0 0
    %322 = vmatpush1.bf16.msra.mxu0 0
    %323 = vmatprep.subr.bf16.mxu0 0
    %324 = vmatpush1.bf16.msra.mxu0 0
    %325 = vmatprep.subr.bf16.mxu0 0
    %326 = vmatpush1.bf16.msra.mxu0 0
    %327 = vmatprep.mubr.bf16.mxu0 0
    %328 = vmatmul.mubr.bf16.gmra.mrb[0].mxu0 %v293
    %v329 = vpop.f32.mrb[0].mxu0
    %v330 = vadd.f32 0.0, %v329
    %v331 = vpop.f32.mrb[0].mxu0
    %v332 = vpop.f32.mrb[0].mxu0
    %v333 = vadd.f32 0.0, %v332
    %v334 = vpop.f32.mrb[0].mxu0
    %335 = vdwg.mxu0
    %v336 = vld [vmem:[%s6] sm:$0xf]
    %v337 = vld [vmem:[%s6 + $0x4] sm:$0xf]
    %v338 = vld [vmem:[%s6 + $0x8] sm:$0xf]
    %v339 = vld [vmem:[%s6 + $0xc] sm:$0xf]
    %v340 = vld [vmem:[%s6 + $0x10] sm:$0xf]
    %v341 = vld [vmem:[%s6 + $0x14] sm:$0xf]
    %v342 = vld [vmem:[%s6 + $0x18] sm:$0xf]
    %v343 = vld [vmem:[%s6 + $0x1c] sm:$0xf]
    %v352 = vunpack.c.l.b16 %v336
    %v353 = vunpack.c.l.b16 %v337
    %v354 = vunpack.c.l.b16 %v338
    %v355 = vunpack.c.l.b16 %v339
    %v356 = vunpack.c.l.b16 %v340
    %v357 = vunpack.c.l.b16 %v341
    %v358 = vunpack.c.l.b16 %v342
    %v359 = vunpack.c.l.b16 %v343
    %v360 = vpack.c.b16 %v353, %v352
    %v361 = vpack.c.b16 %v355, %v354
    %v362 = vpack.c.b16 %v357, %v356
    %v363 = vpack.c.b16 %v359, %v358
    %368 = vmatprep.subr.bf16.mxu0 0
    %369 = vmatpush1.bf16.msra.mxu0 %v360
    %370 = vmatprep.subr.bf16.mxu0 0
    %371 = vmatpush1.bf16.msra.mxu0 %v361
    %372 = vmatprep.subr.bf16.mxu0 0
    %373 = vmatpush1.bf16.msra.mxu0 %v362
    %374 = vmatprep.subr.bf16.mxu0 0
    %375 = vmatpush1.bf16.msra.mxu0 %v363
    %376 = vmatprep.subr.bf16.mxu0 0
    %377 = vmatpush1.bf16.msra.mxu0 0
    %378 = vmatprep.subr.bf16.mxu0 0
    %379 = vmatpush1.bf16.msra.mxu0 0
    %380 = vmatprep.subr.bf16.mxu0 0
    %381 = vmatpush1.bf16.msra.mxu0 0
    %382 = vmatprep.subr.bf16.mxu0 0
    %383 = vmatpush1.bf16.msra.mxu0 0
    %384 = vmatprep.subr.bf16.mxu0 0
    %385 = vmatpush1.bf16.msra.mxu0 0
    %386 = vmatprep.subr.bf16.mxu0 0
    %387 = vmatpush1.bf16.msra.mxu0 0
    %388 = vmatprep.subr.bf16.mxu0 0
    %389 = vmatpush1.bf16.msra.mxu0 0
    %390 = vmatprep.subr.bf16.mxu0 0
    %391 = vmatpush1.bf16.msra.mxu0 0
    %392 = vmatprep.subr.bf16.mxu0 0
    %393 = vmatpush1.bf16.msra.mxu0 0
    %394 = vmatprep.subr.bf16.mxu0 0
    %395 = vmatpush1.bf16.msra.mxu0 0
    %396 = vmatprep.subr.bf16.mxu0 0
    %397 = vmatpush1.bf16.msra.mxu0 0
    %398 = vmatprep.subr.bf16.mxu0 0
    %399 = vmatpush1.bf16.msra.mxu0 0
    %400 = vmatprep.mubr.bf16.mxu0 0
    %401 = vmatmul.mubr.bf16.gmra.mrb[0].mxu0 %v293
    %v402 = vpop.f32.mrb[0].mxu0
    %v403 = vadd.f32 0.0, %v402
    %v404 = vpop.f32.mrb[0].mxu0
    %v405 = vpop.f32.mrb[0].mxu0
    %v406 = vadd.f32 0.0, %v405
    %v407 = vpop.f32.mrb[0].mxu0
    %408 = vdwg.mxu0
    %v409 = vld [vmem:[#allocation9] sm:$0xf]
    %v410 = vld [vmem:[#allocation9 + $0x4] sm:$0xf]
    %v411 = vld [vmem:[#allocation9 + $0x8] sm:$0xf]
    %v412 = vld [vmem:[#allocation9 + $0xc] sm:$0xf]
    %v413 = vld [vmem:[#allocation9 + $0x10] sm:$0xf]
    %v414 = vld [vmem:[#allocation9 + $0x14] sm:$0xf]
    %v415 = vld [vmem:[#allocation9 + $0x18] sm:$0xf]
    %v416 = vld [vmem:[#allocation9 + $0x1c] sm:$0xf]
    %v425 = vunpack.c.l.b16 %v409
    %v426 = vunpack.c.l.b16 %v410
    %v427 = vunpack.c.l.b16 %v411
    %v428 = vunpack.c.l.b16 %v412
    %v429 = vunpack.c.l.b16 %v413
    %v430 = vunpack.c.l.b16 %v414
    %v431 = vunpack.c.l.b16 %v415
    %v432 = vunpack.c.l.b16 %v416
    %v433 = vpack.c.b16 %v426, %v425
    %v434 = vpack.c.b16 %v428, %v427
    %v435 = vpack.c.b16 %v430, %v429
    %v436 = vpack.c.b16 %v432, %v431
    %441 = vmatprep.subr.bf16.mxu0 0
    %442 = vmatpush1.bf16.msra.mxu0 %v433
    %443 = vmatprep.subr.bf16.mxu0 0
    %444 = vmatpush1.bf16.msra.mxu0 %v434
    %445 = vmatprep.subr.bf16.mxu0 0
    %446 = vmatpush1.bf16.msra.mxu0 %v435
    %447 = vmatprep.subr.bf16.mxu0 0
    %448 = vmatpush1.bf16.msra.mxu0 %v436
    %449 = vmatprep.subr.bf16.mxu0 0
    %450 = vmatpush1.bf16.msra.mxu0 0
    %451 = vmatprep.subr.bf16.mxu0 0
    %452 = vmatpush1.bf16.msra.mxu0 0
    %453 = vmatprep.subr.bf16.mxu0 0
    %454 = vmatpush1.bf16.msra.mxu0 0
    %455 = vmatprep.subr.bf16.mxu0 0
    %456 = vmatpush1.bf16.msra.mxu0 0
    %457 = vmatprep.subr.bf16.mxu0 0
    %458 = vmatpush1.bf16.msra.mxu0 0
    %459 = vmatprep.subr.bf16.mxu0 0
    %460 = vmatpush1.bf16.msra.mxu0 0
    %461 = vmatprep.subr.bf16.mxu0 0
    %462 = vmatpush1.bf16.msra.mxu0 0
    %463 = vmatprep.subr.bf16.mxu0 0
    %464 = vmatpush1.bf16.msra.mxu0 0
    %465 = vmatprep.subr.bf16.mxu0 0
    %466 = vmatpush1.bf16.msra.mxu0 0
    %467 = vmatprep.subr.bf16.mxu0 0
    %468 = vmatpush1.bf16.msra.mxu0 0
    %469 = vmatprep.subr.bf16.mxu0 0
    %470 = vmatpush1.bf16.msra.mxu0 0
    %471 = vmatprep.subr.bf16.mxu0 0
    %472 = vmatpush1.bf16.msra.mxu0 0
    %473 = vmatprep.mubr.bf16.mxu0 0
    %474 = vmatmul.mubr.bf16.gmra.mrb[0].mxu0 %v293
    %v475 = vpop.f32.mrb[0].mxu0
    %v476 = vadd.f32 0.0, %v475
    %v477 = vpop.f32.mrb[0].mxu0
    %v478 = vpop.f32.mrb[0].mxu0
    %v479 = vadd.f32 0.0, %v478
    %v480 = vpop.f32.mrb[0].mxu0
    %481 = vdwg.mxu0
    %v482 = vpack.c.bf16 %v330, %v330
    %v483 = vpack.c.bf16 %v403, %v403
    %v484 = vpack.c.bf16 %v476, %v476
    %v486 = vsel %vm215, %v482, 0
    %v489 = vsel %vm215, %v483, 0
    %491 = vmatprep.subr.bf16.mxu0 0
    %492 = vmatpush1.bf16.xpose.msra.mxu0 %v489
    %493 = vmatprep.subr.bf16.mxu0 0
    %494 = vmatpush1.bf16.xpose.msra.mxu0 0
    %495 = vmatprep.subr.bf16.mxu0 0
    %496 = vmatpush1.bf16.xpose.msra.mxu0 0
    %497 = vmatprep.subr.bf16.mxu0 0
    %498 = vmatpush1.bf16.xpose.msra.mxu0 0
    %499 = vmatprep.subr.bf16.mxu0 0
    %500 = vmatpush1.bf16.xpose.msra.mxu0 0
    %501 = vmatprep.subr.bf16.mxu0 0
    %502 = vmatpush1.bf16.xpose.msra.mxu0 0
    %503 = vmatprep.subr.bf16.mxu0 0
    %504 = vmatpush1.bf16.xpose.msra.mxu0 0
    %505 = vmatprep.subr.bf16.mxu0 0
    %506 = vmatpush1.bf16.xpose.msra.mxu0 0
    %507 = vmatprep.subr.bf16.mxu0 0
    %508 = vmatpush1.bf16.xpose.msra.mxu0 0
    %509 = vmatprep.subr.bf16.mxu0 0
    %510 = vmatpush1.bf16.xpose.msra.mxu0 0
    %511 = vmatprep.subr.bf16.mxu0 0
    %512 = vmatpush1.bf16.xpose.msra.mxu0 0
    %513 = vmatprep.subr.bf16.mxu0 0
    %514 = vmatpush1.bf16.xpose.msra.mxu0 0
    %515 = vmatprep.subr.bf16.mxu0 0
    %516 = vmatpush1.bf16.xpose.msra.mxu0 0
    %517 = vmatprep.subr.bf16.mxu0 0
    %518 = vmatpush1.bf16.xpose.msra.mxu0 0
    %519 = vmatprep.subr.bf16.mxu0 0
    %520 = vmatpush1.bf16.xpose.msra.mxu0 0
    %521 = vmatprep.subr.bf16.mxu0 0
    %522 = vmatpush1.bf16.xpose.msra.mxu0 0
    %523 = vmatprep.mubr.bf16.mxu0 0
    %524 = vmatmul.mubr.bf16.gmra.mrb[0].mxu0 %v486
    %v525 = vpop.f32.mrb[0].mxu0
    %v526 = vadd.f32 0.0, %v525
    %v527 = vpop.f32.mrb[0].mxu0
    %v528 = vpop.f32.mrb[0].mxu0
    %v529 = vpop.f32.mrb[0].mxu0
    %530 = vdwg.mxu0
    %vm531 = vcmask 64512
    %v532 = vsel %vm531, %v526, -inf
    %533 = vmax.xlane.f32.xlu0 %v532
    %v534 = vpop.xlane.xlu0 %533
    %v535 = vsub.f32 %v526, %v534
    %v536 = vmul.f32 %v535, 1.442695
    %v537 = vpow.pop %v536
    %v538 = vsel %vm531, %v537, 0.0
    %539 = vadd.xlane.f32.xlu0 %v538
    %v540 = vpop.xlane.xlu0 %539
    %v541 = vrcp.pop %v540
    %v542 = vmul.f32 %v537, %v541
    %v543 = vpack.c.bf16 %v542, %v542
    %v545 = vsel %vm531, %v543, 0
    %vm547 = vcmask 1043456
    %v549 = vsel %vm547, %v484, 0
    %551 = vmatprep.subr.bf16.mxu0 0
    %552 = vmatpush1.bf16.msra.mxu0 %v549
    %553 = vmatprep.subr.bf16.mxu0 0
    %554 = vmatpush1.bf16.msra.mxu0 0
    %555 = vmatprep.subr.bf16.mxu0 0
    %556 = vmatpush1.bf16.msra.mxu0 0
    %557 = vmatprep.subr.bf16.mxu0 0
    %558 = vmatpush1.bf16.msra.mxu0 0
    %559 = vmatprep.subr.bf16.mxu0 0
    %560 = vmatpush1.bf16.msra.mxu0 0
    %561 = vmatprep.subr.bf16.mxu0 0
    %562 = vmatpush1.bf16.msra.mxu0 0
    %563 = vmatprep.subr.bf16.mxu0 0
    %564 = vmatpush1.bf16.msra.mxu0 0
    %565 = vmatprep.subr.bf16.mxu0 0
    %566 = vmatpush1.bf16.msra.mxu0 0
    %567 = vmatprep.subr.bf16.mxu0 0
    %568 = vmatpush1.bf16.msra.mxu0 0
    %569 = vmatprep.subr.bf16.mxu0 0
    %570 = vmatpush1.bf16.msra.mxu0 0
    %571 = vmatprep.subr.bf16.mxu0 0
    %572 = vmatpush1.bf16.msra.mxu0 0
    %573 = vmatprep.subr.bf16.mxu0 0
    %574 = vmatpush1.bf16.msra.mxu0 0
    %575 = vmatprep.subr.bf16.mxu0 0
    %576 = vmatpush1.bf16.msra.mxu0 0
    %577 = vmatprep.subr.bf16.mxu0 0
    %578 = vmatpush1.bf16.msra.mxu0 0
    %579 = vmatprep.subr.bf16.mxu0 0
    %580 = vmatpush1.bf16.msra.mxu0 0
    %581 = vmatprep.subr.bf16.mxu0 0
    %582 = vmatpush1.bf16.msra.mxu0 0
    %583 = vmatprep.mubr.bf16.mxu0 0
    %584 = vmatmul.mubr.bf16.gmra.mrb[0].mxu0 %v545
    %v585 = vpop.f32.mrb[0].mxu0
    %v586 = vadd.f32 0.0, %v585
    %v587 = vpop.f32.mrb[0].mxu0
    %v588 = vpop.f32.mrb[0].mxu0
    %v589 = vpop.f32.mrb[0].mxu0
    %590 = vdwg.mxu0
    %591 = vst.msk [vmem:[#allocation2] sm:$0xff] %vm215, %v586
    %v592 = vpack.c.bf16 %v333, %v333
    %v593 = vpack.c.bf16 %v406, %v406
    %v594 = vpack.c.bf16 %v479, %v479
    %v596 = vsel %vm215, %v592, 0
    %v599 = vsel %vm215, %v593, 0
    %601 = vmatprep.subr.bf16.mxu0 0
    %602 = vmatpush1.bf16.xpose.msra.mxu0 %v599
    %603 = vmatprep.subr.bf16.mxu0 0
    %604 = vmatpush1.bf16.xpose.msra.mxu0 0
    %605 = vmatprep.subr.bf16.mxu0 0
    %606 = vmatpush1.bf16.xpose.msra.mxu0 0
    %607 = vmatprep.subr.bf16.mxu0 0
    %608 = vmatpush1.bf16.xpose.msra.mxu0 0
    %609 = vmatprep.subr.bf16.mxu0 0
    %610 = vmatpush1.bf16.xpose.msra.mxu0 0
    %611 = vmatprep.subr.bf16.mxu0 0
    %612 = vmatpush1.bf16.xpose.msra.mxu0 0
    %613 = vmatprep.subr.bf16.mxu0 0
    %614 = vmatpush1.bf16.xpose.msra.mxu0 0
    %615 = vmatprep.subr.bf16.mxu0 0
    %616 = vmatpush1.bf16.xpose.msra.mxu0 0
    %617 = vmatprep.subr.bf16.mxu0 0
    %618 = vmatpush1.bf16.xpose.msra.mxu0 0
    %619 = vmatprep.subr.bf16.mxu0 0
    %620 = vmatpush1.bf16.xpose.msra.mxu0 0
    %621 = vmatprep.subr.bf16.mxu0 0
    %622 = vmatpush1.bf16.xpose.msra.mxu0 0
    %623 = vmatprep.subr.bf16.mxu0 0
    %624 = vmatpush1.bf16.xpose.msra.mxu0 0
    %625 = vmatprep.subr.bf16.mxu0 0
    %626 = vmatpush1.bf16.xpose.msra.mxu0 0
    %627 = vmatprep.subr.bf16.mxu0 0
    %628 = vmatpush1.bf16.xpose.msra.mxu0 0
    %629 = vmatprep.subr.bf16.mxu0 0
    %630 = vmatpush1.bf16.xpose.msra.mxu0 0
    %631 = vmatprep.subr.bf16.mxu0 0
    %632 = vmatpush1.bf16.xpose.msra.mxu0 0
    %633 = vmatprep.mubr.bf16.mxu0 0
    %634 = vmatmul.mubr.bf16.gmra.mrb[0].mxu0 %v596
    %v635 = vpop.f32.mrb[0].mxu0
    %v636 = vadd.f32 0.0, %v635
    %v637 = vpop.f32.mrb[0].mxu0
    %v638 = vpop.f32.mrb[0].mxu0
    %v639 = vpop.f32.mrb[0].mxu0
    %640 = vdwg.mxu0
    %v641 = vsel %vm531, %v636, -inf
    %642 = vmax.xlane.f32.xlu0 %v641
    %v643 = vpop.xlane.xlu0 %642
    %v644 = vsub.f32 %v636, %v643
    %v645 = vmul.f32 %v644, 1.442695
    %v646 = vpow.pop %v645
    %v647 = vsel %vm531, %v646, 0.0
    %648 = vadd.xlane.f32.xlu0 %v647
    %v649 = vpop.xlane.xlu0 %648
    %v650 = vrcp.pop %v649
    %v651 = vmul.f32 %v646, %v650
    %v652 = vpack.c.bf16 %v651, %v651
    %v654 = vsel %vm531, %v652, 0
    %v657 = vsel %vm547, %v594, 0
    %659 = vmatprep.subr.bf16.mxu0 0
    %660 = vmatpush1.bf16.msra.mxu0 %v657
    %661 = vmatprep.subr.bf16.mxu0 0
    %662 = vmatpush1.bf16.msra.mxu0 0
    %663 = vmatprep.subr.bf16.mxu0 0
    %664 = vmatpush1.bf16.msra.mxu0 0
    %665 = vmatprep.subr.bf16.mxu0 0
    %666 = vmatpush1.bf16.msra.mxu0 0
    %667 = vmatprep.subr.bf16.mxu0 0
    %668 = vmatpush1.bf16.msra.mxu0 0
    %669 = vmatprep.subr.bf16.mxu0 0
    %670 = vmatpush1.bf16.msra.mxu0 0
    %671 = vmatprep.subr.bf16.mxu0 0
    %672 = vmatpush1.bf16.msra.mxu0 0
    %673 = vmatprep.subr.bf16.mxu0 0
    %674 = vmatpush1.bf16.msra.mxu0 0
    %675 = vmatprep.subr.bf16.mxu0 0
    %676 = vmatpush1.bf16.msra.mxu0 0
    %677 = vmatprep.subr.bf16.mxu0 0
    %678 = vmatpush1.bf16.msra.mxu0 0
    %679 = vmatprep.subr.bf16.mxu0 0
    %680 = vmatpush1.bf16.msra.mxu0 0
    %681 = vmatprep.subr.bf16.mxu0 0
    %682 = vmatpush1.bf16.msra.mxu0 0
    %683 = vmatprep.subr.bf16.mxu0 0
    %684 = vmatpush1.bf16.msra.mxu0 0
    %685 = vmatprep.subr.bf16.mxu0 0
    %686 = vmatpush1.bf16.msra.mxu0 0
    %687 = vmatprep.subr.bf16.mxu0 0
    %688 = vmatpush1.bf16.msra.mxu0 0
    %689 = vmatprep.subr.bf16.mxu0 0
    %690 = vmatpush1.bf16.msra.mxu0 0
    %691 = vmatprep.mubr.bf16.mxu0 0
    %692 = vmatmul.mubr.bf16.gmra.mrb[0].mxu0 %v654
    %v693 = vpop.f32.mrb[0].mxu0
    %v694 = vadd.f32 0.0, %v693
    %v695 = vpop.f32.mrb[0].mxu0
    %v696 = vpop.f32.mrb[0].mxu0
    %v697 = vpop.f32.mrb[0].mxu0
    %698 = vdwg.mxu0
    %699 = vst.msk [vmem:[#allocation2 + $0x8] sm:$0xff] %vm215, %v694
    %v700 = vld [vmem:[#allocation2] sm:$0xff]
    %v701 = vld [vmem:[#allocation2 + $0x8] sm:$0xff]
    %v702 = vpack.c.bf16 %v701, %v700
    %v703 = vld [vmem:[#allocation11] sm:$0xf]
    %v704 = vld [vmem:[#allocation11 + $0x4] sm:$0xf]
    %v705 = vld [vmem:[#allocation11 + $0x8] sm:$0xf]
    %v706 = vld [vmem:[#allocation11 + $0xc] sm:$0xf]
    %v707 = vld [vmem:[#allocation11 + $0x10] sm:$0xf]
    %v708 = vld [vmem:[#allocation11 + $0x14] sm:$0xf]
    %v709 = vld [vmem:[#allocation11 + $0x18] sm:$0xf]
    %v710 = vld [vmem:[#allocation11 + $0x1c] sm:$0xf]
    %v711 = vld [vmem:[#allocation12] sm:$0x1]
    %v713 = vlaneseq
    %v714 = vshrl.u32 %v713, 7
    %v715 = vsub.s32 0, %v714
    %v716 = vrot.slane %v711, %v715
    %v726 = vunpack.c.l.b16 %v703
    %v727 = vunpack.c.l.b16 %v704
    %v728 = vunpack.c.l.b16 %v705
    %v729 = vunpack.c.l.b16 %v706
    %v730 = vunpack.c.l.b16 %v707
    %v731 = vunpack.c.l.b16 %v708
    %v732 = vunpack.c.l.b16 %v709
    %v733 = vunpack.c.l.b16 %v710
    %v734 = vpack.c.b16 %v727, %v726
    %v735 = vpack.c.b16 %v729, %v728
    %v736 = vpack.c.b16 %v731, %v730
    %v737 = vpack.c.b16 %v733, %v732
    %v743 = vsel %vm215, %v702, 0
    %745 = vmatprep.subr.bf16.mxu0 0
    %746 = vmatpush1.bf16.msra.mxu0 %v734
    %747 = vmatprep.subr.bf16.mxu0 0
    %748 = vmatpush1.bf16.msra.mxu0 %v735
    %749 = vmatprep.subr.bf16.mxu0 0
    %750 = vmatpush1.bf16.msra.mxu0 %v736
    %751 = vmatprep.subr.bf16.mxu0 0
    %752 = vmatpush1.bf16.msra.mxu0 %v737
    %753 = vmatprep.subr.bf16.mxu0 0
    %754 = vmatpush1.bf16.msra.mxu0 0
    %755 = vmatprep.subr.bf16.mxu0 0
    %756 = vmatpush1.bf16.msra.mxu0 0
    %757 = vmatprep.subr.bf16.mxu0 0
    %758 = vmatpush1.bf16.msra.mxu0 0
    %759 = vmatprep.subr.bf16.mxu0 0
    %760 = vmatpush1.bf16.msra.mxu0 0
    %761 = vmatprep.subr.bf16.mxu0 0
    %762 = vmatpush1.bf16.msra.mxu0 0
    %763 = vmatprep.subr.bf16.mxu0 0
    %764 = vmatpush1.bf16.msra.mxu0 0
    %765 = vmatprep.subr.bf16.mxu0 0
    %766 = vmatpush1.bf16.msra.mxu0 0
    %767 = vmatprep.subr.bf16.mxu0 0
    %768 = vmatpush1.bf16.msra.mxu0 0
    %769 = vmatprep.subr.bf16.mxu0 0
    %770 = vmatpush1.bf16.msra.mxu0 0
    %771 = vmatprep.subr.bf16.mxu0 0
    %772 = vmatpush1.bf16.msra.mxu0 0
    %773 = vmatprep.subr.bf16.mxu0 0
    %774 = vmatpush1.bf16.msra.mxu0 0
    %775 = vmatprep.subr.bf16.mxu0 0
    %776 = vmatpush1.bf16.msra.mxu0 0
    %777 = vmatprep.mubr.bf16.mxu0 0
    %778 = vmatmul.mubr.bf16.gmra.mrb[0].mxu0 %v743
    %v779 = vpop.f32.mrb[0].mxu0
    %v780 = vadd.f32 %v716, %v779
    %v781 = vpop.f32.mrb[0].mxu0
    %v782 = vpop.f32.mrb[0].mxu0
    %v783 = vadd.f32 %v716, %v782
    %v784 = vpop.f32.mrb[0].mxu0
    %785 = vdwg.mxu0
    %v786 = vadd.f32 %v211, %v780
    %v787 = vadd.f32 %v212, %v783
    %v788 = vld [vmem:[%s10] sm:$0x1]
    %v789 = vld [vmem:[%s11] sm:$0x1]
    %v790 = vsel %vm215, %v786, 0.0
    %791 = vadd.xlane.f32.xlu0 %v790
    %v792 = vpop.xlane.xlu0 %791
    %v793 = vsel %vm215, %v787, 0.0
    %794 = vadd.xlane.f32.xlu0 %v793
    %v795 = vpop.xlane.xlu0 %794
    %v796 = vmul.f32 %v792, %v222
    %v797 = vmul.f32 %v795, %v222
    %v798 = vsub.f32 %v786, %v796
    %v799 = vsub.f32 %v787, %v797
    %v800 = vmul.f32 %v798, %v798
    %v801 = vmul.f32 %v799, %v799
    %v802 = vsel %vm215, %v800, 0.0
    %803 = vadd.xlane.f32.xlu0 %v802
    %v804 = vpop.xlane.xlu0 %803
    %v805 = vsel %vm215, %v801, 0.0
    %806 = vadd.xlane.f32.xlu0 %v805
    %v807 = vpop.xlane.xlu0 %806
    %v808 = vmul.f32 %v804, %v222
    %v809 = vmul.f32 %v807, %v222
    %v810 = vadd.f32 %v808, 1e-06
    %v811 = vadd.f32 %v809, 1e-06
    %v812 = vrsqrt.pop %v810
    %v813 = vrsqrt.pop %v811
    %v814 = vmul.f32 %v798, %v812
    %v815 = vmul.f32 %v799, %v813
    %v817 = vlaneseq
    %v818 = vshrl.u32 %v817, 7
    %v819 = vsub.s32 0, %v818
    %v820 = vrot.slane %v788, %v819
    %v822 = vmul.f32 %v814, %v820
    %v823 = vmul.f32 %v815, %v820
    %v825 = vlaneseq
    %v826 = vshrl.u32 %v825, 7
    %v827 = vsub.s32 0, %v826
    %v828 = vrot.slane %v789, %v827
    %v830 = vadd.f32 %v822, %v828
    %v831 = vadd.f32 %v823, %v828
    %v832 = vpack.c.bf16 %v831, %v830
    %v833 = vld [vmem:[%s12] sm:$0xf]
    %v834 = vld [vmem:[%s12 + $0x4] sm:$0xf]
    %v835 = vld [vmem:[%s12 + $0x8] sm:$0xf]
    %v836 = vld [vmem:[%s12 + $0xc] sm:$0xf]
    %v837 = vld [vmem:[%s12 + $0x10] sm:$0xf]
    %v838 = vld [vmem:[%s12 + $0x14] sm:$0xf]
    %v839 = vld [vmem:[%s12 + $0x18] sm:$0xf]
    %v840 = vld [vmem:[%s12 + $0x1c] sm:$0xf]
    %v849 = vunpack.c.l.b16 %v833
    %v850 = vunpack.c.l.b16 %v834
    %v851 = vunpack.c.l.b16 %v835
    %v852 = vunpack.c.l.b16 %v836
    %v853 = vunpack.c.l.b16 %v837
    %v854 = vunpack.c.l.b16 %v838
    %v855 = vunpack.c.l.b16 %v839
    %v856 = vunpack.c.l.b16 %v840
    %v857 = vpack.c.b16 %v850, %v849
    %v858 = vpack.c.b16 %v852, %v851
    %v859 = vpack.c.b16 %v854, %v853
    %v860 = vpack.c.b16 %v856, %v855
    %v866 = vsel %vm215, %v832, 0
    %868 = vmatprep.subr.bf16.mxu0 0
    %869 = vmatpush1.bf16.msra.mxu0 %v857
    %870 = vmatprep.subr.bf16.mxu0 0
    %871 = vmatpush1.bf16.msra.mxu0 %v858
    %872 = vmatprep.subr.bf16.mxu0 0
    %873 = vmatpush1.bf16.msra.mxu0 %v859
    %874 = vmatprep.subr.bf16.mxu0 0
    %875 = vmatpush1.bf16.msra.mxu0 %v860
    %876 = vmatprep.subr.bf16.mxu0 0
    %877 = vmatpush1.bf16.msra.mxu0 0
    %878 = vmatprep.subr.bf16.mxu0 0
    %879 = vmatpush1.bf16.msra.mxu0 0
    %880 = vmatprep.subr.bf16.mxu0 0
    %881 = vmatpush1.bf16.msra.mxu0 0
    %882 = vmatprep.subr.bf16.mxu0 0
    %883 = vmatpush1.bf16.msra.mxu0 0
    %884 = vmatprep.subr.bf16.mxu0 0
    %885 = vmatpush1.bf16.msra.mxu0 0
    %886 = vmatprep.subr.bf16.mxu0 0
    %887 = vmatpush1.bf16.msra.mxu0 0
    %888 = vmatprep.subr.bf16.mxu0 0
    %889 = vmatpush1.bf16.msra.mxu0 0
    %890 = vmatprep.subr.bf16.mxu0 0
    %891 = vmatpush1.bf16.msra.mxu0 0
    %892 = vmatprep.subr.bf16.mxu0 0
    %893 = vmatpush1.bf16.msra.mxu0 0
    %894 = vmatprep.subr.bf16.mxu0 0
    %895 = vmatpush1.bf16.msra.mxu0 0
    %896 = vmatprep.subr.bf16.mxu0 0
    %897 = vmatpush1.bf16.msra.mxu0 0
    %898 = vmatprep.subr.bf16.mxu0 0
    %899 = vmatpush1.bf16.msra.mxu0 0
    %900 = vmatprep.mubr.bf16.mxu0 0
    %901 = vmatmul.mubr.bf16.gmra.mrb[0].mxu0 %v866
    %v902 = vpop.f32.mrb[0].mxu0
    %v903 = vadd.f32 0.0, %v902
    %v904 = vpop.f32.mrb[0].mxu0
    %v905 = vpop.f32.mrb[0].mxu0
    %v906 = vadd.f32 0.0, %v905
    %v907 = vpop.f32.mrb[0].mxu0
    %908 = vdwg.mxu0
    %v909 = vmul.f32 %v903, 0.5
    %v910 = vmul.f32 %v906, 0.5
    %v911 = vmul.f32 %v903, %v903
    %v912 = vmul.f32 %v906, %v906
    %v913 = vmul.f32 %v911, %v903
    %v914 = vmul.f32 %v912, %v906
    %v915 = vmul.f32 %v913, 0.044715
    %v916 = vmul.f32 %v914, 0.044715
    %v917 = vadd.f32 %v903, %v915
    %v918 = vadd.f32 %v906, %v916
    %v919 = vmul.f32 %v917, 0.7978846
    %v920 = vmul.f32 %v918, 0.7978846
    %v921 = vtanh.pop %v919
    %v922 = vtanh.pop %v920
    %v923 = vadd.f32 %v921, 1.0
    %v924 = vadd.f32 %v922, 1.0
    %v925 = vmul.f32 %v909, %v923
    %v926 = vmul.f32 %v910, %v924
    %v927 = vadd.f32 %v124, %v925
    %v928 = vadd.f32 %v125, %v926
    %929 = vst.msk [vmem:[#allocation14] sm:$0xff] %vm150, %v927
    %930 = vst.msk [vmem:[#allocation14 + $0x8] sm:$0xff] %vm150, %v928
    // Predicated region
    $region78: #{tpu_custom_call.1} parent=1 // pred_check
      _
    $region79: #{tpu_custom_call.1} parent=1 // pred_check_branch
      %932 = sbr.rel (0) target = $region81
    $region80: #{tpu_custom_call.1} parent=1 // pred_region
      %s934 = ssub.s32 256, 256
      %935 = vsyncadd [#allocation5], %s934
      %s936 = sshll.u32 [#allocation14], 4
      %s937 = int_to_ptr.vmem [resolvable:$true] %s936
      %942 = dma.vmem_to_hbm [thread:$0]  %s937, 256, %s13, [#allocation5], 128, 128, 8
    $region81: #{tpu_custom_call.1} parent=1 // pred_fallthru
      _
    // Predicated region
    $region82: #{tpu_custom_call.1} parent=1 // pred_check
      _
    $region83: #{tpu_custom_call.1} parent=1 // pred_check_branch
      %944 = sbr.rel (0) target = $region85
    $region84: #{tpu_custom_call.1} parent=1 // pred_region
      %945 = dma.done [#allocation5], 256
    $region85: #{tpu_custom_call.1} parent=1 // pred_fallthru
      _
    %946 = vsyncpa [#allocation4], 1
    %947 = vsyncpa [#allocation7], 1
    %948 = vsyncpa [#allocation10], 1
    %949 = vsyncpa [#allocation13], 1
    %950 = vsyncpa [#allocation5], 1

</llo_original>
